<compile_context>
chip_gen: v7x
topology: tpu7x:2x2x1
jax: 0.10.0
libtpu: 0.0.40
codegen_flags: <defaults>
</compile_context>

<pallas_src>
import jax
import jax.numpy as jnp
from jax.experimental import pallas as pl
from jax.experimental.pallas import tpu as pltpu

_LANE = 128
_VMEM_LIMIT = 48 * 1024 * 1024    # scoped VMEM override (v5e default is only 16 MiB)
_TILE_BUDGET = 36 * 1024 * 1024   # budget for all double-buffered tiles, headroom under the limit
_TILE_CAP = 6 * 1024 * 1024       # per-x-tile ceiling (4-6 MiB sweet spot across v5e/v6e/v7x)


def _sinusoid_table(n_position: int, d_hid: int) -> jnp.ndarray:
    """Sinusoid position encoding table, shape [1, n_position, d_hid] (f32)."""
    pos = jnp.arange(n_position, dtype=jnp.float32)[:, None]            # [P, 1]
    hid = jnp.arange(d_hid, dtype=jnp.float32)[None, :]                 # [1, D]
    exponent = 2.0 * jnp.floor(hid / 2.0) / float(d_hid)
    angles = pos / jnp.power(10000.0, exponent)                         # [P, D]
    even = (jnp.arange(d_hid) % 2 == 0)
    table = jnp.where(even[None, :], jnp.sin(angles), jnp.cos(angles))
    return table[None, :, :].astype(jnp.float32)                        # [1, P, D]


def _add_pe_kernel(x_ref, pe_ref, o_ref):
    # Broadcast-add of the f32 PE tile over the leading (batch) block dim;
    # single cast on the store (mem-bound kernel: VPU work is free filler).
    o_ref[...] = (x_ref[...] + pe_ref[...]).astype(o_ref.dtype)


# Module-level index maps (stable identities -> stable pallas_call cache keys).
def _x_index_batchfold(i):
    return (i, 0, 0)


def _pe_index_batchfold(i):
    return (0, 0, 0)          # constant -> PE tile DMA'd once for the whole grid


def _x_index_rowtile(r, b):
    return (b, r, 0)


def _pe_index_rowtile(r, b):
    return (0, r, 0)          # b-invariant -> PE tile DMA'd once per row tile


def _sublane_multiple(dtype) -> int:
    # f32 packs 8 sublanes per vreg; 2-byte dtypes pack 16; 1-byte dtypes pack 32.
    isz = jnp.dtype(dtype).itemsize
    if isz == 1:
        return 32
    if isz == 2:
        return 16
    return 8


def _target_tile_bytes(itemsize: int) -> int:
    # 2x x + 2x out + 2x f32 PE tiles, expressed in units of one x tile.
    buffers = 4 + max(1, 8 // itemsize)
    return min(_TILE_CAP, _TILE_BUDGET // buffers)


def _row_tile(num_rows: int, row_bytes: int, sub: int, target: int) -> int:
    """Rows per tile: ~target bytes, multiple of `sub` (or full extent)."""
    t = max(1, target // max(row_bytes, 1))
    t = (t // sub) * sub
    if t <= 0:
        t = min(sub, num_rows)
    t = min(t, num_rows)
    if t % sub != 0:
        t = num_rows  # full extent is always a legal block dim
    return t


class PositionalEncodingPallas:
    """Pallas TPU equivalent of the PyTorch PositionalEncoding module."""

    def __init__(self, d_hid: int = 300, n_position: int = 200):
        self.d_hid = int(d_hid)
        self.n_position = int(n_position)
        # f32 table, shape (1, n_position, d_hid) -- kept in f32 (reference numerics).
        self.pos_table = _sinusoid_table(self.n_position, self.d_hid)
        # Cache of preprocessed (sliced / lane-dense reshaped) PE operands,
        # keyed by layout -> the per-call wrapper does no table work under jit.
        self._pe_cache = {}

    # ---- layout planning -------------------------------------------------
    def _layout(self, S: int, D: int):
        """Per-batch 2-D slab layout (R, C); lane-dense fold when D % 128 != 0."""
        if D % _LANE == 0:
            return S, D, False
        total = S * D
        if total % _LANE == 0:
            C = _LANE
            for cand in range(_LANE, min(total, 4096) + 1, _LANE):
                if total % cand == 0:
                    C = cand
            return total // C, C, True
        # TODO(synk): (S*D) % 128 != 0 falls back to the masked-store native
        # layout; wrapper-side padding would cost an extra HBM round trip.
        return S, D, False

    def _prepared_pe(self, S: int, R: int, C: int, fold: bool) -> jnp.ndarray:
        key = (S, R, C, fold)
        pe = self._pe_cache.get(key)
        if pe is None:
            pe = self.pos_table[:, :S, :]          # concrete slice, computed once
            if fold:
                pe = pe.reshape(1, R, C)
            self._pe_cache[key] = pe
        return pe

    # ---- forward -----------------------------------------------------------
    def __call__(self, x: jnp.ndarray) -> jnp.ndarray:
        B, S, D = x.shape
        assert D == self.d_hid, f"expected last dim {self.d_hid}, got {D}"
        assert S <= self.n_position, f"sequence length {S} > n_position {self.n_position}"

        dtype = x.dtype
        itemsize = jnp.dtype(dtype).itemsize
        sub = _sublane_multiple(dtype)
        target = _target_tile_bytes(itemsize)

        R, C, fold = self._layout(S, D)
        pe = self._prepared_pe(S, R, C, fold)           # f32, cached (hoisted prep)
        xin = x.reshape(B, R, C) if fold else x

        slab_bytes = R * C * itemsize
        cparams_1d = pltpu.CompilerParams(
            dimension_semantics=("parallel",), vmem_limit_bytes=_VMEM_LIMIT)
        cparams_2d = pltpu.CompilerParams(
            dimension_semantics=("parallel", "parallel"), vmem_limit_bytes=_VMEM_LIMIT)

        if slab_bytes <= target:
            # --- Batch-folding regime (small per-batch slab) -----------------
            # Blocks (TB, R, C) for x/out; a single constant (1, R, C) PE block
            # (DMA'd once). Last two block dims equal the array dims -> always
            # a legal tiling, lane-dense when fold=True.
            TB = max(1, min(B, target // max(slab_bytes, 1)))
            out = pl.pallas_call(
                _add_pe_kernel,
                out_shape=jax.ShapeDtypeStruct((B, R, C), dtype),
                grid_spec=pltpu.PrefetchScalarGridSpec(
                    num_scalar_prefetch=0,
                    grid=(pl.cdiv(B, TB),),
                    in_specs=[
                        pl.BlockSpec((TB, R, C), _x_index_batchfold),   # x tile
                        pl.BlockSpec((1, R, C), _pe_index_batchfold),   # PE (constant)
                    ],
                    out_specs=pl.BlockSpec((TB, R, C), _x_index_batchfold),
                ),
                compiler_params=cparams_1d,
                input_output_aliases={0: 0},      # write result into x's buffer
            )(xin, pe)
        else:
            # --- Row-tiling regime (large per-batch slab) ---------------------
            # ~4-6 MiB row tiles, double-buffered; inner B axis keeps the same
            # PE block index so the PE tile is fetched once per row tile.
            TR = _row_tile(R, C * itemsize, sub, target)
            out = pl.pallas_call(
                _add_pe_kernel,
                out_shape=jax.ShapeDtypeStruct((B, R, C), dtype),
                grid_spec=pltpu.PrefetchScalarGridSpec(
                    num_scalar_prefetch=0,
                    grid=(pl.cdiv(R, TR), B),
                    in_specs=[
                        pl.BlockSpec((1, TR, C), _x_index_rowtile),     # x tile
                        pl.BlockSpec((1, TR, C), _pe_index_rowtile),    # PE (b-invariant)
                    ],
                    out_specs=pl.BlockSpec((1, TR, C), _x_index_rowtile),
                ),
                compiler_params=cparams_2d,
                input_output_aliases={0: 0},      # write result into x's buffer
            )(xin, pe)

        return out.reshape(B, S, D) if fold else out


if __name__ == "__main__":
    # Small shapes consistent with the module: d_hid=32, n_position=16, seq=8, batch=2.
    B, S, D = 2, 8, 32
    n_position = 16

    module = PositionalEncodingPallas(d_hid=D, n_position=n_position)

    key = jax.random.PRNGKey(0)
    x = jax.random.normal(key, (B, S, D), dtype=jnp.float32)

    # Reference computed first (plain JAX), so aliasing can never disturb the check.
    ref = x + module.pos_table[:, :S, :]

    out = module(x)
    out = jax.block_until_ready(out)

    assert out.shape == (B, S, D)
    assert jnp.allclose(out, ref, atol=1e-6, rtol=1e-6)

    print("KERNEL_OK")
</pallas_src>

<mosaic_0001>
module attributes {stable_mosaic.version = 11 : i64} {
  func.func @_add_pe_kernel(%arg0: i32, %arg1: memref<2x1x256xf32, #tpu.memory_space<vmem>>, %arg2: memref<1x1x256xf32, #tpu.memory_space<vmem>>, %arg3: memref<2x1x256xf32, #tpu.memory_space<vmem>>) attributes {dimension_semantics = [#tpu.dimension_semantics<parallel>], iteration_bounds = array<i64: 1>, scalar_prefetch = 0 : i64, scratch_operands = 0 : i64, tpu.core_type = #tpu.core_type<tc>, window_params = [{transform_indices = @transform_0, window_bounds = array<i64: 2, 1, 256>}, {pipeline_mode = #tpu.pipeline_mode<synchronous>, transform_indices = @transform_1, window_bounds = array<i64: 1, 1, 256>}, {transform_indices = @transform_2, window_bounds = array<i64: 2, 1, 256>}]} {
    %c0 = arith.constant 0 : index
    %c0_0 = arith.constant 0 : index
    %c0_1 = arith.constant 0 : index
    %0 = vector.load %arg1[%c0, %c0_0, %c0_1] : memref<2x1x256xf32, #tpu.memory_space<vmem>>, vector<2x1x256xf32>
    %c0_2 = arith.constant 0 : index
    %c0_3 = arith.constant 0 : index
    %c0_4 = arith.constant 0 : index
    %1 = vector.load %arg2[%c0_2, %c0_3, %c0_4] : memref<1x1x256xf32, #tpu.memory_space<vmem>>, vector<1x1x256xf32>
    %2 = vector.broadcast %1 : vector<1x1x256xf32> to vector<2x1x256xf32>
    %3 = arith.addf %0, %2 : vector<2x1x256xf32>
    %c0_5 = arith.constant 0 : index
    %c0_6 = arith.constant 0 : index
    %c0_7 = arith.constant 0 : index
    %4 = vector.load %arg3[%c0_5, %c0_6, %c0_7] : memref<2x1x256xf32, #tpu.memory_space<vmem>>, vector<2x1x256xf32>
    tpu.vector_store %arg3[%c0_5, %c0_6, %c0_7], %3 {strides = array<i32>} : memref<2x1x256xf32, #tpu.memory_space<vmem>>, vector<2x1x256xf32>,
    return
  }
  func.func @transform_0(%arg0: i32) -> (i32, i32, i32) {
    %c0_i32 = arith.constant 0 : i32
    %c0_i32_0 = arith.constant 0 : i32
    %c0_i32_1 = arith.constant 0 : i32
    return %arg0, %c0_i32, %c0_i32_0 : i32, i32, i32
  }
  func.func @transform_1(%arg0: i32) -> (i32, i32, i32) {
    %c0_i32 = arith.constant 0 : i32
    %c0_i32_0 = arith.constant 0 : i32
    %c0_i32_1 = arith.constant 0 : i32
    %c0_i32_2 = arith.constant 0 : i32
    return %c0_i32, %c0_i32_0, %c0_i32_1 : i32, i32, i32
  }
  func.func @transform_2(%arg0: i32) -> (i32, i32, i32) {
    %c0_i32 = arith.constant 0 : i32
    %c0_i32_0 = arith.constant 0 : i32
    %c0_i32_1 = arith.constant 0 : i32
    return %arg0, %c0_i32, %c0_i32_0 : i32, i32, i32
  }
}

</mosaic_0001>

<llo_original>
// kernel: tpu_custom_call.1
$region0: #{tpu_custom_call.1}
  #allocation0 [shape = 'u32[]', space=smem, size = 0x4, offset = 0x4, fixed_abs, tag = 'smem constant byte address 0x4 - core index']
  #allocation1 [shape = 'u32[144,128]{1,0:T(1,128)}', space=vmem, size = 0x12000, scoped, tag = 'internal scratch']
  %s0 = inlined_call_operand.hbm [shape: f32[2,1,256], index: 0, kind: input, shape index: {}, may-alias: {0,2}]
  %s1 = inlined_call_operand.vmem [shape: f32[1,1,256], index: 1, kind: input, shape index: {}]
  %s2 = inlined_call_operand.hbm [shape: f32[2,1,256], index: 2, kind: output, shape index: {}, may-alias: {0,2}]
  %s3 = sld [smem:[#allocation0]]
  $region22: #{tpu_custom_call.1} parent=0
    _
  %s5 = ssub.s32 1, %s3
  %s6 = scalar_select 0, %s5, %s3
  $region1: #{tpu_custom_call.1} parent=0
    #allocation2 [shape = 'u8[2048]{0}', space=vmem, size = 0x800, scoped, tag = 'input window, operand 0, single buffered']
    #allocation3 [shape = 's32[1]{0}', space=sflag, size = 0x4, scoped, tag = 'scoped memory for tpu_custom_call.1']
    #allocation4 [shape = 's32[1]{0}', space=sflag, size = 0x4, scoped, tag = 'scoped memory for tpu_custom_call.1']
    #allocation5 [shape = 'u8[2048]{0}', space=vmem, size = 0x800, scoped, tag = 'output window, operand 0, single buffered']
    %7 = vsyncpa [#allocation3], 0
    %8 = vsyncpa [#allocation4], 0
    // Predicated region
    $region2: #{tpu_custom_call.1} parent=1 // pred_check
      _
    $region3: #{tpu_custom_call.1} parent=1 // pred_check_branch
      %10 = sbr.rel (0) target = $region5
    $region4: #{tpu_custom_call.1} parent=1 // pred_region
      %s12 = ssub.s32 64, 64
      %13 = vsyncadd [#allocation3], %s12
      %s14 = sshll.u32 [#allocation2], 4
      %s15 = int_to_ptr.vmem [resolvable:$true] %s14
      %20 = dma.hbm_to_vmem [thread:$0]  %s0, 64, %s15, [#allocation3], 32, 32, 2
    $region5: #{tpu_custom_call.1} parent=1 // pred_fallthru
      _
    // Predicated region
    $region6: #{tpu_custom_call.1} parent=1 // pred_check
      _
    $region7: #{tpu_custom_call.1} parent=1 // pred_check_branch
      %22 = sbr.rel (0) target = $region9
    $region8: #{tpu_custom_call.1} parent=1 // pred_region
      _
    $region9: #{tpu_custom_call.1} parent=1 // pred_fallthru
      _
    // Predicated region
    $region10: #{tpu_custom_call.1} parent=1 // pred_check
      _
    $region11: #{tpu_custom_call.1} parent=1 // pred_check_branch
      %24 = sbr.rel (0) target = $region13
    $region12: #{tpu_custom_call.1} parent=1 // pred_region
      %25 = dma.done [#allocation3], 64
    $region13: #{tpu_custom_call.1} parent=1 // pred_fallthru
      _
    %v26 = vld [vmem:[#allocation2] sm:$0x3]
    %v27 = vld [vmem:[#allocation2 + $0x2] sm:$0x3]
    %v28 = vld [vmem:[%s1] sm:$0x3]
    %v29 = vadd.f32 %v26, %v28
    %v30 = vadd.f32 %v27, %v28
    %v31 = vlaneseq
    %vm32 = vcmp.ge.s32.totalorder %v31, 0
    %vm33 = vcmp.lt.s32.totalorder %v31, 256
    %vm34 = vmand %vm32, %vm33
    %35 = vst.msk [vmem:[#allocation5] sm:$0x3] %vm34, %v29
    %36 = vst.msk [vmem:[#allocation5 + $0x2] sm:$0x3] %vm34, %v30
    // Predicated region
    $region14: #{tpu_custom_call.1} parent=1 // pred_check
      _
    $region15: #{tpu_custom_call.1} parent=1 // pred_check_branch
      %38 = sbr.rel (0) target = $region17
    $region16: #{tpu_custom_call.1} parent=1 // pred_region
      %s40 = ssub.s32 64, 64
      %41 = vsyncadd [#allocation4], %s40
      %s42 = sshll.u32 [#allocation5], 4
      %s43 = int_to_ptr.vmem [resolvable:$true] %s42
      %48 = dma.vmem_to_hbm [thread:$0]  %s43, 64, %s2, [#allocation4], 32, 32, 2
    $region17: #{tpu_custom_call.1} parent=1 // pred_fallthru
      _
    // Predicated region
    $region18: #{tpu_custom_call.1} parent=1 // pred_check
      _
    $region19: #{tpu_custom_call.1} parent=1 // pred_check_branch
      %50 = sbr.rel (0) target = $region21
    $region20: #{tpu_custom_call.1} parent=1 // pred_region
      %51 = dma.done [#allocation4], 64
    $region21: #{tpu_custom_call.1} parent=1 // pred_fallthru
      _
    %52 = vsyncpa [#allocation3], 1
    %53 = vsyncpa [#allocation4], 1

</llo_original>
